<compile_context>
chip_gen: v5e
topology: v5e:2x2
jax: 0.10.0
libtpu: 0.0.40
codegen_flags: <defaults>
</compile_context>

<pallas_src>
import jax
import jax.numpy as jnp
from jax.experimental import pallas as pl
from jax.experimental.pallas import tpu as pltpu


_LANE = 128
_FAST_PATH_BYTES = 4 * 1024 * 1024       # f32-equivalent input footprint for the no-grid path
_STREAM_VMEM_BUDGET = 24 * 1024 * 1024   # VMEM for blocks + accumulators + temporaries
_VMEM_LIMIT = 32 * 1024 * 1024           # scoped limit; safe on v5e / v6e / v7x


def _cdiv(a, b):
    return -(-a // b)


def _round_down(x, m):
    return (x // m) * m


def _round_up(x, m):
    return _cdiv(x, m) * m


def _num_tensorcores():
    """2 on multi-TensorCore chips (v4 / v5p / v7x), else 1 (perf-only choice)."""
    try:
        kind = jax.devices()[0].device_kind.lower()
    except Exception:
        return 1
    if any(tag in kind for tag in ("v4", "v5p", "v7", "tpu7")):
        return 2
    return 1


def _pick_tile_lanes(k_layers, in_itemsize):
    """Node lanes per streaming tile, sized so the whole working set fits the budget."""
    per_lane = (2 * (k_layers + 1) * in_itemsize      # double-buffered input blocks
                + 4 * (k_layers + 1)                  # f32 accumulators
                + 4 * (k_layers + 2))                 # f32 temporaries (sq, masks, upcast)
    lanes = _STREAM_VMEM_BUDGET // per_lane
    return int(max(_LANE, _round_down(lanes, _LANE)))


# ----------------------------- fast path (no grid) -----------------------------

def _loss_kernel_small(psrc_ref, imb_ref, ssum_out, cnt_out):
    src = psrc_ref[...] == 0                       # (1, N) bool: "source" nodes
    imb = imb_ref[...].astype(jnp.float32)         # (K, N)
    sq = jnp.where(src, imb * imb, 0.0)            # mask broadcast over K
    ssum_out[...] = jnp.sum(sq).reshape(1, 1)
    cnt_out[...] = jnp.sum(jnp.where(src, 1.0, 0.0)).reshape(1, 1)


# --------------------------- streaming path (tiled) ----------------------------

def _make_sparse_stream_kernel(n_nodes, n_tile):
    """Tiles of shape (K, n_tile): node axis along lanes. Works for any N."""
    def kernel(psrc_ref, imb_ref, ssum_out, cnt_out, acc_sq, acc_cnt):
        c = pl.program_id(0)
        t = pl.program_id(1)
        tiles_per_split = pl.num_programs(1)

        # reset this core's accumulators at the start of its tile sweep
        @pl.when(t == 0)
        def _():
            acc_sq[...] = jnp.zeros_like(acc_sq)
            acc_cnt[...] = jnp.zeros_like(acc_cnt)

        tile_idx = c * tiles_per_split + t            # global (unclamped) tile index
        src_raw = psrc_ref[...] == 0                  # (1, n_tile) bool
        imb = imb_ref[...].astype(jnp.float32)        # (K, n_tile)

        def accumulate(src):
            # pure VPU: select + mul + add per tile; no per-tile XLU reduce
            acc_sq[...] += jnp.where(src, imb * imb, 0.0)
            acc_cnt[...] += jnp.where(src, 1.0, 0.0)

        is_full = (tile_idx + 1) * n_tile <= n_nodes

        # interior tiles: minimal op count (no tail-mask work)
        @pl.when(is_full)
        def _():
            accumulate(src_raw)

        # ragged last tile (and fully out-of-range tiles of an uneven split):
        # lanes beyond n_nodes hold undefined data and must be excluded.
        @pl.when(jnp.logical_not(is_full))
        def _():
            lane = jax.lax.broadcasted_iota(jnp.int32, (1, n_tile), 1)
            valid = lane < (n_nodes - tile_idx * n_tile)
            accumulate(jnp.logical_and(src_raw, valid))

        # single cross-lane/sublane reduce + 1-lane store, once per core
        @pl.when(t == tiles_per_split - 1)
        def _():
            ssum_out[...] = jnp.sum(acc_sq[...]).reshape(1, 1, 1)
            cnt_out[...] = jnp.sum(acc_cnt[...]).reshape(1, 1, 1)

    return kernel


def _make_dense_stream_kernel(n_rows, r_tile):
    """Sublane-dense tiles (K, r_tile, 128). Requires N % 128 == 0 (free reshape)."""
    def kernel(psrc_ref, imb_ref, ssum_out, cnt_out, acc_sq, acc_cnt):
        c = pl.program_id(0)
        t = pl.program_id(1)
        tiles_per_split = pl.num_programs(1)

        @pl.when(t == 0)
        def _():
            acc_sq[...] = jnp.zeros_like(acc_sq)
            acc_cnt[...] = jnp.zeros_like(acc_cnt)

        tile_idx = c * tiles_per_split + t
        src_raw = psrc_ref[...] == 0                  # (r_tile, 128) bool
        imb = imb_ref[...].astype(jnp.float32)        # (K, r_tile, 128)

        def accumulate(src):
            acc_sq[...] += jnp.where(src, imb * imb, 0.0)
            acc_cnt[...] += jnp.where(src, 1.0, 0.0)

        is_full = (tile_idx + 1) * r_tile <= n_rows

        @pl.when(is_full)
        def _():
            accumulate(src_raw)

        @pl.when(jnp.logical_not(is_full))
        def _():
            row = jax.lax.broadcasted_iota(jnp.int32, (r_tile, _LANE), 0)
            valid = row < (n_rows - tile_idx * r_tile)
            accumulate(jnp.logical_and(src_raw, valid))

        @pl.when(t == tiles_per_split - 1)
        def _():
            ssum_out[...] = jnp.sum(acc_sq[...]).reshape(1, 1, 1)
            cnt_out[...] = jnp.sum(acc_cnt[...]).reshape(1, 1, 1)

    return kernel


# ----------------------------------- wrapper -----------------------------------

def multi_hydraulics_loss(x, P, imbalances, gamma, *,
                          force_stream=False, tile_lanes=None, num_splits=None):
    """x: [N, F] node features; P: unused; imbalances: [K, N, 1]; gamma: float."""
    del P  # not used by the reference forward either
    K = int(imbalances.shape[0])
    N = int(imbalances.shape[1])

    # sum(gammas * losses) == losses * sum(gammas): fold into one compile-time scalar
    gamma_sum = jnp.float32(sum(gamma ** (K - k) for k in range(1, K + 1)))

    psrc_flat = x[:, -1]                    # [N]  (tiny strided copy, N*itemsize bytes)
    imb_flat = imbalances.reshape(K, N)     # free squeeze; NO pad, NO copy

    use_fast = (not force_stream) and ((K + 1) * N * 4 <= _FAST_PATH_BYTES)

    if use_fast:
        # -------- single-block fast path: whole problem in VMEM, no grid --------
        ssum, cnt = pl.pallas_call(
            _loss_kernel_small,
            out_shape=(jax.ShapeDtypeStruct((1, 1), jnp.float32),
                       jax.ShapeDtypeStruct((1, 1), jnp.float32)),
            in_specs=[pl.BlockSpec(memory_space=pltpu.MemorySpace.VMEM),
                      pl.BlockSpec(memory_space=pltpu.MemorySpace.VMEM)],
            out_specs=(pl.BlockSpec(memory_space=pltpu.MemorySpace.VMEM),
                       pl.BlockSpec(memory_space=pltpu.MemorySpace.VMEM)),
            compiler_params=pltpu.CompilerParams(vmem_limit_bytes=_VMEM_LIMIT),
        )(psrc_flat.reshape(1, N), imb_flat)
        ssum_total = ssum[0, 0]
        cnt_total = cnt[0, 0]
    else:
        # -------------------------- streaming path ------------------------------
        itemsize = max(jnp.dtype(imb_flat.dtype).itemsize,
                       jnp.dtype(psrc_flat.dtype).itemsize)
        node_lanes = int(tile_lanes) if tile_lanes is not None \
            else _pick_tile_lanes(K, itemsize)
        splits_req = int(num_splits) if num_splits is not None else _num_tensorcores()
        dense = (N % _LANE) == 0            # sublane-dense layout only when it is free

        if dense:
            n_rows = N // _LANE
            r_tile = max(8, _round_down(max(node_lanes // _LANE, 8), 8))
            r_tile = min(r_tile, _round_up(n_rows, 8))
            tiles_total = _cdiv(n_rows, r_tile)
            splits = max(1, min(splits_req, tiles_total))
            tiles_per_split = _cdiv(tiles_total, splits)
            last_block = tiles_total - 1

            def blk(c, t):  # clamp the rare out-of-range points of an uneven split
                return jnp.minimum(c * tiles_per_split + t, last_block)

            in_specs = [
                pl.BlockSpec((r_tile, _LANE), lambda c, t: (blk(c, t), 0)),
                pl.BlockSpec((K, r_tile, _LANE), lambda c, t: (0, blk(c, t), 0)),
            ]
            kernel = _make_dense_stream_kernel(n_rows, r_tile)
            scratch = [pltpu.VMEM((K, r_tile, _LANE), jnp.float32),
                       pltpu.VMEM((r_tile, _LANE), jnp.float32)]
            inputs = (psrc_flat.reshape(n_rows, _LANE),
                      imb_flat.reshape(K, n_rows, _LANE))
        else:
            n_tile = max(_LANE, _round_down(node_lanes, _LANE))
            n_tile = min(n_tile, _round_up(N, _LANE))
            tiles_total = _cdiv(N, n_tile)
            splits = max(1, min(splits_req, tiles_total))
            tiles_per_split = _cdiv(tiles_total, splits)
            last_block = tiles_total - 1

            def blk(c, t):
                return jnp.minimum(c * tiles_per_split + t, last_block)

            in_specs = [
                pl.BlockSpec((1, n_tile), lambda c, t: (0, blk(c, t))),
                pl.BlockSpec((K, n_tile), lambda c, t: (0, blk(c, t))),
            ]
            kernel = _make_sparse_stream_kernel(N, n_tile)
            scratch = [pltpu.VMEM((K, n_tile), jnp.float32),
                       pltpu.VMEM((1, n_tile), jnp.float32)]
            inputs = (psrc_flat.reshape(1, N), imb_flat)

        ssum, cnt = pl.pallas_call(
            kernel,
            grid=(splits, tiles_per_split),
            in_specs=in_specs,
            out_specs=(pl.BlockSpec((1, 1, 1), lambda c, t: (c, 0, 0)),
                       pl.BlockSpec((1, 1, 1), lambda c, t: (c, 0, 0))),
            out_shape=(jax.ShapeDtypeStruct((splits, 1, 1), jnp.float32),
                       jax.ShapeDtypeStruct((splits, 1, 1), jnp.float32)),
            scratch_shapes=scratch,
            compiler_params=pltpu.CompilerParams(
                dimension_semantics=("parallel", "arbitrary"),
                vmem_limit_bytes=_VMEM_LIMIT),
        )(*inputs)
        ssum_total = jnp.sum(ssum)
        cnt_total = jnp.sum(cnt)

    # mean over the [K, count] slice == ssum / (K * count); NaN when count == 0,
    # exactly like the PyTorch reference.
    mean_loss = ssum_total / (cnt_total * jnp.float32(K))
    return gamma_sum * mean_loss


# ---------------------------------- reference -----------------------------------

def _reference(x, imbalances, gamma):
    """Pure-JAX reference mirroring the PyTorch code (uses boolean indexing)."""
    K = imbalances.shape[0]
    psrc = x[:, -1]
    mask = psrc == 0.0
    imb = imbalances.reshape(K, -1)                    # squeeze trailing 1
    sel = imb[:, mask]                                 # [K, count]
    losses = jnp.mean(jnp.square(sel.astype(jnp.float32)))
    gammas = jnp.asarray([gamma ** (K - kk) for kk in range(1, K + 1)],
                         dtype=jnp.float32)
    return jnp.sum(gammas * losses)


if __name__ == "__main__":
    key = jax.random.PRNGKey(0)
    k1, k2, k3, k4, k5, k6 = jax.random.split(key, 6)

    gamma = 0.9
    K, F = 3, 4

    # ---- small case (module-typical): exercises the single-block fast path ----
    N1 = 16
    x1 = jax.random.normal(k1, (N1, F), dtype=jnp.float32)
    psrc1 = jnp.where(jnp.arange(N1) % 3 == 0, 0.0, 1.0).astype(jnp.float32)
    x1 = x1.at[:, -1].set(psrc1)
    P1 = jnp.zeros((N1, 1), dtype=jnp.float32)          # unused by the loss
    imb1 = jax.random.normal(k2, (K, N1, 1), dtype=jnp.float32)

    out1 = jax.block_until_ready(multi_hydraulics_loss(x1, P1, imb1, gamma))
    ref1 = _reference(x1, imb1, gamma)
    assert jnp.allclose(out1, ref1, rtol=1e-5, atol=1e-6), (out1, ref1)

    # ---- non-multiple-of-128 N, forced streaming: ragged tail + uneven split ----
    N2 = 1100
    x2 = jax.random.normal(k3, (N2, F), dtype=jnp.float32)
    psrc2 = jnp.where(jnp.arange(N2) % 7 == 0, 0.0, 1.0).astype(jnp.float32)
    x2 = x2.at[:, -1].set(psrc2)
    P2 = jnp.zeros((N2, 1), dtype=jnp.float32)
    imb2 = jax.random.normal(k4, (K, N2, 1), dtype=jnp.float32)

    out2 = jax.block_until_ready(
        multi_hydraulics_loss(x2, P2, imb2, gamma,
                              force_stream=True, tile_lanes=256, num_splits=2))
    ref2 = _reference(x2, imb2, gamma)
    assert jnp.allclose(out2, ref2, rtol=1e-5, atol=1e-6), (out2, ref2)

    # ---- multiple-of-128 N, forced streaming: sublane-dense path + ragged rows ----
    N3 = 1280
    x3 = jax.random.normal(k5, (N3, F), dtype=jnp.float32)
    psrc3 = jnp.where(jnp.arange(N3) % 5 == 0, 0.0, 1.0).astype(jnp.float32)
    x3 = x3.at[:, -1].set(psrc3)
    P3 = jnp.zeros((N3, 1), dtype=jnp.float32)
    imb3 = jax.random.normal(k6, (K, N3, 1), dtype=jnp.float32)

    out3 = jax.block_until_ready(
        multi_hydraulics_loss(x3, P3, imb3, gamma,
                              force_stream=True, tile_lanes=256, num_splits=2))
    ref3 = _reference(x3, imb3, gamma)
    assert jnp.allclose(out3, ref3, rtol=1e-5, atol=1e-6), (out3, ref3)

    print("KERNEL_OK")
</pallas_src>

<mosaic_0001>
module attributes {stable_mosaic.version = 11 : i64} {
  func.func @_loss_kernel_small(%arg0: memref<1x16xf32, #tpu.memory_space<vmem>>, %arg1: memref<3x16xf32, #tpu.memory_space<vmem>>, %arg2: memref<1x1xf32, #tpu.memory_space<vmem>>, %arg3: memref<1x1xf32, #tpu.memory_space<vmem>>) attributes {dimension_semantics = [], scalar_prefetch = 0 : i64, scratch_operands = 0 : i64, tpu.core_type = #tpu.core_type<tc>} {
    %c0 = arith.constant 0 : index
    %c0_0 = arith.constant 0 : index
    %0 = vector.load %arg0[%c0, %c0_0] : memref<1x16xf32, #tpu.memory_space<vmem>>, vector<1x16xf32>
    %cst = arith.constant 0.000000e+00 : f32
    %1 = vector.broadcast %cst : f32 to vector<1x16xf32>
    %2 = arith.cmpf oeq, %0, %1 : vector<1x16xf32>
    %c0_1 = arith.constant 0 : index
    %c0_2 = arith.constant 0 : index
    %3 = vector.load %arg1[%c0_1, %c0_2] : memref<3x16xf32, #tpu.memory_space<vmem>>, vector<3x16xf32>
    %4 = arith.mulf %3, %3 : vector<3x16xf32>
    %cst_3 = arith.constant 0.000000e+00 : f32
    %5 = vector.shape_cast %2 : vector<1x16xi1> to vector<1x16xi1>
    %6 = vector.broadcast %5 : vector<1x16xi1> to vector<3x16xi1>
    %7 = vector.broadcast %cst_3 : f32 to vector<3x16xf32>
    %8 = arith.select %6, %4, %7 : vector<3x16xi1>, vector<3x16xf32>
    %9 = vector.shape_cast %8 : vector<3x16xf32> to vector<1x3x16xf32>
    %cst_4 = arith.constant dense<0.000000e+00> : vector<1xf32>
    %10 = vector.multi_reduction <add>, %9, %cst_4 [1, 2] : vector<1x3x16xf32> to vector<1xf32>
    %11 = vector.shape_cast %10 : vector<1xf32> to vector<1x1x1xf32>
    %12 = vector.extract %11[0, 0, 0] : f32 from vector<1x1x1xf32>
    %13 = vector.broadcast %12 : f32 to vector<1x1xf32>
    %c0_5 = arith.constant 0 : index
    %c0_6 = arith.constant 0 : index
    %14 = vector.load %arg2[%c0_5, %c0_6] : memref<1x1xf32, #tpu.memory_space<vmem>>, vector<1x1xf32>
    tpu.vector_store %arg2[%c0_5, %c0_6], %13 {strides = array<i32>} : memref<1x1xf32, #tpu.memory_space<vmem>>, vector<1x1xf32>,
    %cst_7 = arith.constant 1.000000e+00 : f32
    %cst_8 = arith.constant 0.000000e+00 : f32
    %15 = vector.broadcast %cst_7 : f32 to vector<1x16xf32>
    %16 = vector.broadcast %cst_8 : f32 to vector<1x16xf32>
    %17 = arith.select %2, %15, %16 : vector<1x16xi1>, vector<1x16xf32>
    %18 = vector.shape_cast %17 : vector<1x16xf32> to vector<1x1x16xf32>
    %cst_9 = arith.constant dense<0.000000e+00> : vector<1xf32>
    %19 = vector.multi_reduction <add>, %18, %cst_9 [1, 2] : vector<1x1x16xf32> to vector<1xf32>
    %20 = vector.shape_cast %19 : vector<1xf32> to vector<1x1x1xf32>
    %21 = vector.extract %20[0, 0, 0] : f32 from vector<1x1x1xf32>
    %22 = vector.broadcast %21 : f32 to vector<1x1xf32>
    %c0_10 = arith.constant 0 : index
    %c0_11 = arith.constant 0 : index
    %23 = vector.load %arg3[%c0_10, %c0_11] : memref<1x1xf32, #tpu.memory_space<vmem>>, vector<1x1xf32>
    tpu.vector_store %arg3[%c0_10, %c0_11], %22 {strides = array<i32>} : memref<1x1xf32, #tpu.memory_space<vmem>>, vector<1x1xf32>,
    return
  }
}

</mosaic_0001>

<llo_original>
// kernel: tpu_custom_call.1
$region0: #{tpu_custom_call.1}
  #allocation0 [shape = 'u32[]', space=smem, size = 0x4, offset = 0x4, fixed_abs, tag = 'smem constant byte address 0x4 - core index']
  #allocation1 [shape = 'u32[72,128]{1,0:T(1,128)}', space=vmem, size = 0x9000, scoped, tag = 'internal scratch']
  %s0 = inlined_call_operand.hbm [shape: f32[1,16], index: 0, kind: input, shape index: {}]
  %s1 = inlined_call_operand.hbm [shape: f32[3,16], index: 1, kind: input, shape index: {}]
  %s2 = inlined_call_operand.hbm [shape: f32[1,1], index: 2, kind: output, shape index: {0}]
  %s3 = inlined_call_operand.hbm [shape: f32[1,1], index: 3, kind: output, shape index: {1}]
  %4 = xla_tuple %s2, %s3
  %s5 = sld [smem:[#allocation0]]
  $region34: #{tpu_custom_call.1} parent=0
    _
  %s7 = ssub.s32 1, %s5
  %s8 = scalar_select 0, %s7, %s5
  $region1: #{tpu_custom_call.1} parent=0
    #allocation2 [shape = 'u8[512]{0}', space=vmem, size = 0x400, scoped, tag = 'input window, operand 0, single buffered']
    #allocation3 [shape = 's32[1]{0}', space=sflag, size = 0x4, scoped, tag = 'scoped memory for tpu_custom_call.1']
    #allocation4 [shape = 's32[1]{0}', space=sflag, size = 0x4, scoped, tag = 'scoped memory for tpu_custom_call.1']
    #allocation5 [shape = 'u8[2048]{0}', space=vmem, size = 0x800, scoped, tag = 'input window, operand 1, single buffered']
    #allocation6 [shape = 's32[1]{0}', space=sflag, size = 0x4, scoped, tag = 'scoped memory for tpu_custom_call.1']
    #allocation7 [shape = 'u8[512]{0}', space=vmem, size = 0x400, scoped, tag = 'output window, operand 0, single buffered']
    #allocation8 [shape = 'u8[512]{0}', space=vmem, size = 0x400, scoped, tag = 'output window, operand 1, single buffered']
    #allocation9 [shape = 's32[1]{0}', space=sflag, size = 0x4, scoped, tag = 'scoped memory for tpu_custom_call.1']
    %9 = vsyncpa [#allocation3], 0
    %10 = vsyncpa [#allocation6], 0
    %11 = vsyncpa [#allocation4], 0
    %12 = vsyncpa [#allocation9], 0
    // Predicated region
    $region2: #{tpu_custom_call.1} parent=1 // pred_check
      _
    $region3: #{tpu_custom_call.1} parent=1 // pred_check_branch
      %14 = sbr.rel (0) target = $region5
    $region4: #{tpu_custom_call.1} parent=1 // pred_region
      %16 = vsyncadd [#allocation3], 0
      %s18 = sshll.u32 %s0, 4
      %s19 = int_to_ptr.hbm [resolvable:$true] %s18
      %s20 = sshll.u32 [#allocation2], 4
      %s21 = int_to_ptr.vmem [resolvable:$true] %s20
      %23 = dma.hbm_to_vmem [thread:$0]  %s19, 16, %s21, [#allocation3]
    $region5: #{tpu_custom_call.1} parent=1 // pred_fallthru
      _
    // Predicated region
    $region6: #{tpu_custom_call.1} parent=1 // pred_check
      _
    $region7: #{tpu_custom_call.1} parent=1 // pred_check_branch
      %25 = sbr.rel (0) target = $region9
    $region8: #{tpu_custom_call.1} parent=1 // pred_region
      %27 = vsyncadd [#allocation6], 0
      %s29 = sshll.u32 %s1, 4
      %s30 = int_to_ptr.hbm [resolvable:$true] %s29
      %s31 = sshll.u32 [#allocation5], 4
      %s32 = int_to_ptr.vmem [resolvable:$true] %s31
      %34 = dma.hbm_to_vmem [thread:$0]  %s30, 64, %s32, [#allocation6]
    $region9: #{tpu_custom_call.1} parent=1 // pred_fallthru
      _
    // Predicated region
    $region10: #{tpu_custom_call.1} parent=1 // pred_check
      _
    $region11: #{tpu_custom_call.1} parent=1 // pred_check_branch
      %36 = sbr.rel (0) target = $region13
    $region12: #{tpu_custom_call.1} parent=1 // pred_region
      %38 = dma.done [#allocation3], 16
    $region13: #{tpu_custom_call.1} parent=1 // pred_fallthru
      _
    // Predicated region
    $region14: #{tpu_custom_call.1} parent=1 // pred_check
      _
    $region15: #{tpu_custom_call.1} parent=1 // pred_check_branch
      %40 = sbr.rel (0) target = $region17
    $region16: #{tpu_custom_call.1} parent=1 // pred_region
      %42 = dma.done [#allocation6], 64
    $region17: #{tpu_custom_call.1} parent=1 // pred_fallthru
      _
    %v43 = vld [vmem:[#allocation2] sm:$0x1]
    %vm44 = vcmp.eq.f32.partialorder %v43, 0.0
    %v45 = vld [vmem:[#allocation5] sm:$0x7]
    %v46 = vmul.f32 %v45, %v45
    %v47 = vsel %vm44, 1, 0
    %v48 = vperm.slane %v47, 0
    %vm49 = vcmp.eq.s32.totalorder %v48, 1
    %v50 = vsel %vm49, %v46, 0.0
    %vm51 = vcmask 124928
    %v52 = vsel %vm51, %v50, 0.0
    %53 = vadd.xlane.f32.xlu0 %v52
    %v54 = vpop.xlane.xlu0 %53
    %v55 = vrot.slane %v54, 4
    %v56 = vadd.f32 %v54, %v55
    %v57 = vrot.slane %v56, 2
    %v58 = vadd.f32 %v56, %v57
    %v59 = vrot.slane %v58, 1
    %v60 = vadd.f32 %v58, %v59
    %s61 = vtos %v60
    %v62 = vstv %s61
    %vm63 = vcmask 0
    %64 = vst.msk [vmem:[#allocation7] sm:$0x1] %vm63, %v62
    %v65 = vsel %vm44, 1.0, 0.0
    %vm66 = vcmask 122880
    %v67 = vsel %vm66, %v65, 0.0
    %68 = vadd.xlane.f32.xlu0 %v67
    %v69 = vpop.xlane.xlu0 %68
    %v70 = vrot.slane %v69, 4
    %v71 = vadd.f32 %v69, %v70
    %v72 = vrot.slane %v71, 2
    %v73 = vadd.f32 %v71, %v72
    %v74 = vrot.slane %v73, 1
    %v75 = vadd.f32 %v73, %v74
    %s76 = vtos %v75
    %v77 = vstv %s76
    %78 = vst.msk [vmem:[#allocation8] sm:$0x1] %vm63, %v77
    // Predicated region
    $region18: #{tpu_custom_call.1} parent=1 // pred_check
      _
    $region19: #{tpu_custom_call.1} parent=1 // pred_check_branch
      %80 = sbr.rel (0) target = $region21
    $region20: #{tpu_custom_call.1} parent=1 // pred_region
      %82 = vsyncadd [#allocation4], 0
      %s84 = sshll.u32 [#allocation7], 4
      %s85 = int_to_ptr.vmem [resolvable:$true] %s84
      %s86 = sshll.u32 %s2, 4
      %s87 = int_to_ptr.hbm [resolvable:$true] %s86
      %89 = dma.vmem_to_hbm [thread:$0]  %s85, 16, %s87, [#allocation4]
    $region21: #{tpu_custom_call.1} parent=1 // pred_fallthru
      _
    // Predicated region
    $region22: #{tpu_custom_call.1} parent=1 // pred_check
      _
    $region23: #{tpu_custom_call.1} parent=1 // pred_check_branch
      %91 = sbr.rel (0) target = $region25
    $region24: #{tpu_custom_call.1} parent=1 // pred_region
      %93 = vsyncadd [#allocation9], 0
      %s95 = sshll.u32 [#allocation8], 4
      %s96 = int_to_ptr.vmem [resolvable:$true] %s95
      %s97 = sshll.u32 %s3, 4
      %s98 = int_to_ptr.hbm [resolvable:$true] %s97
      %100 = dma.vmem_to_hbm [thread:$0]  %s96, 16, %s98, [#allocation9]
    $region25: #{tpu_custom_call.1} parent=1 // pred_fallthru
      _
    // Predicated region
    $region26: #{tpu_custom_call.1} parent=1 // pred_check
      _
    $region27: #{tpu_custom_call.1} parent=1 // pred_check_branch
      %102 = sbr.rel (0) target = $region29
    $region28: #{tpu_custom_call.1} parent=1 // pred_region
      %104 = dma.done [#allocation4], 16
    $region29: #{tpu_custom_call.1} parent=1 // pred_fallthru
      _
    // Predicated region
    $region30: #{tpu_custom_call.1} parent=1 // pred_check
      _
    $region31: #{tpu_custom_call.1} parent=1 // pred_check_branch
      %106 = sbr.rel (0) target = $region33
    $region32: #{tpu_custom_call.1} parent=1 // pred_region
      %108 = dma.done [#allocation9], 16
    $region33: #{tpu_custom_call.1} parent=1 // pred_fallthru
      _
    %109 = vsyncpa [#allocation3], 1
    %110 = vsyncpa [#allocation6], 1
    %111 = vsyncpa [#allocation4], 1
    %112 = vsyncpa [#allocation9], 1

</llo_original>
